<compile_context>
chip_gen: v6e
topology: v6e:2x2x1
jax: 0.10.0
libtpu: 0.0.40
codegen_flags: <defaults>
</compile_context>

<pallas_src>
import jax
import jax.numpy as jnp
from jax import lax
from jax.experimental import pallas as pl
from jax.experimental.pallas import tpu as pltpu

EPS = 1e-5
LANE = 128


# ----------------------------------------------------------------------------
# Kernels
# ----------------------------------------------------------------------------
def masked_bn_kernel(count_ref, x_ref, mask_ref, gamma_ref, beta_ref, y_ref):
    """Single-pass path: one full-N, lane-dense feature slab per program."""
    x = x_ref[...].astype(jnp.float32)            # (N, TF)
    m = mask_ref[...].astype(jnp.float32)         # (N, 1), already 0/1 (int8)

    # Masked-row count comes scalar-prefetched in SMEM (free scalar read).
    cnt = jnp.maximum(count_ref[0].astype(jnp.float32), 1.0)
    inv_cnt = 1.0 / cnt

    # Single sweep over the slab: E[x] and E[x^2] accumulated in f32.
    xm = x * m
    s1 = jnp.sum(xm, axis=0, keepdims=True)       # (1, TF)
    s2 = jnp.sum(xm * x, axis=0, keepdims=True)   # (1, TF)

    mean = s1 * inv_cnt
    var = jnp.maximum(s2 * inv_cnt - mean * mean, 0.0)   # biased var, >=0 guard

    scale = lax.rsqrt(var + EPS) * gamma_ref[...]        # (1, TF)
    shift = beta_ref[...] - mean * scale                 # (1, TF)

    # Folded affine: one fma + one mask multiply per output element.
    y_ref[...] = ((x * scale + shift) * m).astype(y_ref.dtype)


def stats_kernel(x_ref, mask_ref, s1_ref, s2_ref):
    """Large-N fallback, phase 1: accumulate masked sums over N tiles."""
    k = pl.program_id(1)                          # N axis (last, "arbitrary")

    @pl.when(k == 0)
    def _():
        s1_ref[...] = jnp.zeros_like(s1_ref)
        s2_ref[...] = jnp.zeros_like(s2_ref)

    x = x_ref[...].astype(jnp.float32)            # (TN, TF)
    m = mask_ref[...].astype(jnp.float32)         # (TN, 1)
    xm = x * m
    s1_ref[...] += jnp.sum(xm, axis=0, keepdims=True)
    s2_ref[...] += jnp.sum(xm * x, axis=0, keepdims=True)


def normalize_kernel(x_ref, mask_ref, scale_ref, shift_ref, y_ref):
    """Large-N fallback, phase 2: fully parallel elementwise normalize."""
    x = x_ref[...].astype(jnp.float32)
    m = mask_ref[...].astype(jnp.float32)
    y_ref[...] = ((x * scale_ref[...] + shift_ref[...]) * m).astype(y_ref.dtype)


# ----------------------------------------------------------------------------
# Wrapper
# ----------------------------------------------------------------------------
def _round_up(v, mult):
    return ((v + mult - 1) // mult) * mult


def _vmem_capacity_bytes():
    try:
        return int(pltpu.get_tpu_info().vmem_capacity_bytes)
    except Exception:
        return 64 * 1024 * 1024  # conservative (v7x per-TC VMEM)


def _pick_tile_f(nblk, max_d, min_tiles):
    """Largest divisor d of nblk with d <= max_d and nblk // d >= min_tiles."""
    min_tiles = max(1, min(min_tiles, nblk))
    max_d = max(1, min(max_d, nblk // min_tiles))
    best = 1
    for d in range(1, max_d + 1):
        if nblk % d == 0:
            best = d
    return best * LANE


def masked_batch_norm_1d(x, mask, gamma, beta):
    """x: (N, F), mask: (N,), gamma/beta: (F,). Returns (N, F) in x.dtype."""
    n, f = x.shape
    in_it = jnp.dtype(x.dtype).itemsize
    out_dtype = x.dtype
    out_it = jnp.dtype(out_dtype).itemsize
    cap = _vmem_capacity_bytes()

    # Lane-pad features only to a multiple of 128 (never to a multiple of TF).
    f_pad = _round_up(f, LANE)
    nblk = f_pad // LANE

    mask01 = mask > 0
    mask_i8 = mask01.astype(jnp.int8).reshape(n, 1)            # small VMEM tile
    count = jnp.sum(mask01).astype(jnp.int32).reshape(1)       # scalar prefetch
    gamma_row = gamma.astype(jnp.float32).reshape(1, f)
    beta_row = beta.astype(jnp.float32).reshape(1, f)
    if f_pad != f:
        gamma_row = jnp.pad(gamma_row, ((0, 0), (0, f_pad - f)),
                            constant_values=1.0)
        beta_row = jnp.pad(beta_row, ((0, 0), (0, f_pad - f)))

    # --- VMEM accounting for the single-pass (full-N column slab) path -------
    # int8 (N,1) block is stored as (32,128) tiles -> ~128*N bytes per buffer.
    mask_buf = _round_up(n, 32) * LANE
    # Per 1-column cost: double-buffered in + out slabs, ~2 f32 temp slabs
    # (xm, xm*x) of in-kernel intermediates, plus affine rows.
    per_col = 2 * n * in_it + 2 * n * out_it + 2 * n * 4 + 4 * 8 * 4
    budget = int(0.75 * cap) - 2 * mask_buf
    max_d = budget // (per_col * LANE) if budget > 0 else 0

    if max_d >= 1:
        # Keep >=4 feature tiles (when possible) for pipeline overlap and to
        # give each v7x TensorCore at least 2 tiles.
        tf = _pick_tile_f(nblk, max_d, min_tiles=4)
        grid = (f_pad // tf,)

        x_p = x if f_pad == f else jnp.pad(x, ((0, 0), (0, f_pad - f)))

        pipe_bytes = (2 * n * tf * in_it + 2 * n * tf * out_it
                      + 2 * mask_buf + 4 * 8 * tf * 4)
        vlimit = max(32 << 20,
                     min(cap, pipe_bytes + 2 * n * tf * 4 + (8 << 20)))

        y_p = pl.pallas_call(
            masked_bn_kernel,
            out_shape=jax.ShapeDtypeStruct((n, f_pad), out_dtype),
            grid_spec=pltpu.PrefetchScalarGridSpec(
                num_scalar_prefetch=1,
                grid=grid,
                in_specs=[
                    pl.BlockSpec((n, tf), lambda j, c: (0, j)),   # x slab
                    pl.BlockSpec((n, 1), lambda j, c: (0, 0)),    # int8 mask
                    pl.BlockSpec((1, tf), lambda j, c: (0, j)),   # gamma
                    pl.BlockSpec((1, tf), lambda j, c: (0, j)),   # beta
                ],
                out_specs=pl.BlockSpec((n, tf), lambda j, c: (0, j)),
            ),
            compiler_params=pltpu.CompilerParams(
                dimension_semantics=("parallel",),   # megacore over feature tiles
                vmem_limit_bytes=int(vlimit),
            ),
        )(count, x_p, mask_i8, gamma_row, beta_row)
        return y_p if f_pad == f else y_p[:, :f]

    # --- large-N fallback: two-phase (N-tiled reduce, then normalize) --------
    tn = min(_round_up(n, 8), 1024)
    n_pad = _round_up(n, tn)
    mask_buf_fb = _round_up(tn, 32) * LANE
    per_col_fb = 2 * tn * in_it + 2 * tn * out_it + 2 * tn * 4 + 4 * 8 * 4
    budget_fb = int(0.75 * cap) - 2 * mask_buf_fb
    max_d_fb = max(1, budget_fb // (per_col_fb * LANE))
    tf = _pick_tile_f(nblk, max_d_fb, min_tiles=2)

    x_p, mask_p = x, mask_i8
    if n_pad != n or f_pad != f:
        x_p = jnp.pad(x, ((0, n_pad - n), (0, f_pad - f)))
        mask_p = jnp.pad(mask_i8, ((0, n_pad - n), (0, 0)))   # padded rows masked out

    grid2d = (f_pad // tf, n_pad // tn)
    vlimit_fb = max(32 << 20,
                    min(cap, 2 * tn * tf * in_it + 2 * tn * tf * out_it
                        + 2 * mask_buf_fb + 2 * tn * tf * 4 + (8 << 20)))

    s1, s2 = pl.pallas_call(
        stats_kernel,
        out_shape=(jax.ShapeDtypeStruct((1, f_pad), jnp.float32),
                   jax.ShapeDtypeStruct((1, f_pad), jnp.float32)),
        grid=grid2d,
        in_specs=[
            pl.BlockSpec((tn, tf), lambda j, k: (k, j)),
            pl.BlockSpec((tn, 1), lambda j, k: (k, 0)),
        ],
        out_specs=(pl.BlockSpec((1, tf), lambda j, k: (0, j)),
                   pl.BlockSpec((1, tf), lambda j, k: (0, j))),
        compiler_params=pltpu.CompilerParams(
            dimension_semantics=("parallel", "arbitrary"),
            vmem_limit_bytes=int(vlimit_fb),
        ),
    )(x_p, mask_p)

    cnt = jnp.maximum(count[0].astype(jnp.float32), 1.0)
    mean = s1 / cnt
    var = jnp.maximum(s2 / cnt - mean * mean, 0.0)
    scale = lax.rsqrt(var + EPS) * gamma_row
    shift = beta_row - mean * scale

    y_p = pl.pallas_call(
        normalize_kernel,
        out_shape=jax.ShapeDtypeStruct((n_pad, f_pad), out_dtype),
        grid=grid2d,
        in_specs=[
            pl.BlockSpec((tn, tf), lambda j, k: (k, j)),
            pl.BlockSpec((tn, 1), lambda j, k: (k, 0)),
            pl.BlockSpec((1, tf), lambda j, k: (0, j)),
            pl.BlockSpec((1, tf), lambda j, k: (0, j)),
        ],
        out_specs=pl.BlockSpec((tn, tf), lambda j, k: (k, j)),
        compiler_params=pltpu.CompilerParams(
            dimension_semantics=("parallel", "parallel"),
            vmem_limit_bytes=int(vlimit_fb),
        ),
    )(x_p, mask_p, scale, shift)
    if n_pad != n or f_pad != f:
        y_p = y_p[:n, :f]
    return y_p


# ----------------------------------------------------------------------------
# Reference + test
# ----------------------------------------------------------------------------
def reference(x, mask, gamma, beta):
    m = mask > 0
    xs = x[m]
    mean = xs.mean(axis=0)
    var = ((xs - mean) ** 2).mean(axis=0)          # biased, like BN training mode
    y_i = (xs - mean) / jnp.sqrt(var + EPS) * gamma + beta
    return jnp.zeros_like(x).at[m].set(y_i)


if __name__ == "__main__":
    key = jax.random.PRNGKey(0)
    kx, kg, kb = jax.random.split(key, 3)

    N, F = 8, 32                      # batch rows, feature_n
    x = jax.random.normal(kx, (N, F), dtype=jnp.float32)
    # Deterministic mask with both selected and skipped rows.
    mask = jnp.array([1, 0, 1, 1, 0, 1, 1, 0], dtype=jnp.float32)
    # Non-trivial affine params (nn.BatchNorm1d's learnable weight/bias).
    gamma = 1.0 + 0.1 * jax.random.normal(kg, (F,), dtype=jnp.float32)
    beta = 0.1 * jax.random.normal(kb, (F,), dtype=jnp.float32)

    y = masked_batch_norm_1d(x, mask, gamma, beta)
    jax.block_until_ready(y)

    y_ref = reference(x, mask, gamma, beta)
    assert y.shape == x.shape
    assert jnp.allclose(y, y_ref, atol=1e-4, rtol=1e-4), "mismatch vs reference"

    # TODO(synk): running_mean/running_var momentum updates (training-time side
    # effects of nn.BatchNorm1d) are not part of the forward output and are not
    # modeled here.
    print("KERNEL_OK")
</pallas_src>

<mosaic_0001>
module attributes {stable_mosaic.version = 11 : i64} {
  func.func @masked_bn_kernel(%arg0: i32, %arg1: memref<1xi32, #tpu.memory_space<smem>>, %arg2: memref<8x128xf32, #tpu.memory_space<vmem>>, %arg3: memref<8x1xi8, #tpu.memory_space<vmem>>, %arg4: memref<1x128xf32, #tpu.memory_space<vmem>>, %arg5: memref<1x128xf32, #tpu.memory_space<vmem>>, %arg6: memref<8x128xf32, #tpu.memory_space<vmem>>) attributes {dimension_semantics = [#tpu.dimension_semantics<parallel>], iteration_bounds = array<i64: 1>, scalar_prefetch = 1 : i64, scratch_operands = 0 : i64, tpu.core_type = #tpu.core_type<tc>, window_params = [{transform_indices = @transform_0, window_bounds = array<i64: 8, 128>}, {pipeline_mode = #tpu.pipeline_mode<synchronous>, transform_indices = @transform_1, window_bounds = array<i64: 8, 1>}, {transform_indices = @transform_2, window_bounds = array<i64: 1, 128>}, {transform_indices = @transform_3, window_bounds = array<i64: 1, 128>}, {transform_indices = @transform_4, window_bounds = array<i64: 8, 128>}]} {
    %c0 = arith.constant 0 : index
    %c0_0 = arith.constant 0 : index
    %0 = vector.load %arg2[%c0, %c0_0] : memref<8x128xf32, #tpu.memory_space<vmem>>, vector<8x128xf32>
    %c0_1 = arith.constant 0 : index
    %c0_2 = arith.constant 0 : index
    %1 = vector.load %arg3[%c0_1, %c0_2] : memref<8x1xi8, #tpu.memory_space<vmem>>, vector<8x1xi8>
    %2 = arith.sitofp %1 : vector<8x1xi8> to vector<8x1xf32>
    %c0_3 = arith.constant 0 : index
    %3 = memref.load %arg1[%c0_3] : memref<1xi32, #tpu.memory_space<smem>>
    %4 = arith.sitofp %3 : i32 to f32
    %cst = arith.constant 1.000000e+00 : f32
    %5 = arith.maximumf %4, %cst : f32
    %cst_4 = arith.constant 1.000000e+00 : f32
    %6 = arith.divf %cst_4, %5 : f32
    %7 = vector.broadcast %2 : vector<8x1xf32> to vector<8x128xf32>
    %8 = arith.mulf %0, %7 : vector<8x128xf32>
    %cst_5 = arith.constant dense<0.000000e+00> : vector<128xf32>
    %9 = vector.multi_reduction <add>, %8, %cst_5 [0] : vector<8x128xf32> to vector<128xf32>
    %10 = vector.shape_cast %9 : vector<128xf32> to vector<1x128xf32>
    %11 = arith.mulf %8, %0 : vector<8x128xf32>
    %cst_6 = arith.constant dense<0.000000e+00> : vector<128xf32>
    %12 = vector.multi_reduction <add>, %11, %cst_6 [0] : vector<8x128xf32> to vector<128xf32>
    %13 = vector.shape_cast %12 : vector<128xf32> to vector<1x128xf32>
    %14 = vector.broadcast %6 : f32 to vector<1x128xf32>
    %15 = arith.mulf %10, %14 : vector<1x128xf32>
    %16 = vector.broadcast %6 : f32 to vector<1x128xf32>
    %17 = arith.mulf %13, %16 : vector<1x128xf32>
    %18 = arith.mulf %15, %15 : vector<1x128xf32>
    %19 = arith.subf %17, %18 : vector<1x128xf32>
    %cst_7 = arith.constant 0.000000e+00 : f32
    %20 = vector.broadcast %cst_7 : f32 to vector<1x128xf32>
    %21 = arith.maximumf %19, %20 : vector<1x128xf32>
    %cst_8 = arith.constant 9.99999974E-6 : f32
    %22 = vector.broadcast %cst_8 : f32 to vector<1x128xf32>
    %23 = arith.addf %21, %22 : vector<1x128xf32>
    %24 = math.rsqrt %23 : vector<1x128xf32>
    %c0_9 = arith.constant 0 : index
    %c0_10 = arith.constant 0 : index
    %25 = vector.load %arg4[%c0_9, %c0_10] : memref<1x128xf32, #tpu.memory_space<vmem>>, vector<1x128xf32>
    %26 = arith.mulf %24, %25 : vector<1x128xf32>
    %c0_11 = arith.constant 0 : index
    %c0_12 = arith.constant 0 : index
    %27 = vector.load %arg5[%c0_11, %c0_12] : memref<1x128xf32, #tpu.memory_space<vmem>>, vector<1x128xf32>
    %28 = arith.mulf %15, %26 : vector<1x128xf32>
    %29 = arith.subf %27, %28 : vector<1x128xf32>
    %30 = vector.broadcast %26 : vector<1x128xf32> to vector<8x128xf32>
    %31 = arith.mulf %0, %30 : vector<8x128xf32>
    %32 = vector.broadcast %29 : vector<1x128xf32> to vector<8x128xf32>
    %33 = arith.addf %31, %32 : vector<8x128xf32>
    %34 = vector.broadcast %2 : vector<8x1xf32> to vector<8x128xf32>
    %35 = arith.mulf %33, %34 : vector<8x128xf32>
    %c0_13 = arith.constant 0 : index
    %c0_14 = arith.constant 0 : index
    %36 = vector.load %arg6[%c0_13, %c0_14] : memref<8x128xf32, #tpu.memory_space<vmem>>, vector<8x128xf32>
    tpu.vector_store %arg6[%c0_13, %c0_14], %35 {strides = array<i32>} : memref<8x128xf32, #tpu.memory_space<vmem>>, vector<8x128xf32>,
    return
  }
  func.func @transform_0(%arg0: i32, %arg1: memref<1xi32, #tpu.memory_space<smem>>) -> (i32, i32) {
    %c0_i32 = arith.constant 0 : i32
    %c0_i32_0 = arith.constant 0 : i32
    return %c0_i32, %arg0 : i32, i32
  }
  func.func @transform_1(%arg0: i32, %arg1: memref<1xi32, #tpu.memory_space<smem>>) -> (i32, i32) {
    %c0_i32 = arith.constant 0 : i32
    %c0_i32_0 = arith.constant 0 : i32
    %c0_i32_1 = arith.constant 0 : i32
    return %c0_i32, %c0_i32_0 : i32, i32
  }
  func.func @transform_2(%arg0: i32, %arg1: memref<1xi32, #tpu.memory_space<smem>>) -> (i32, i32) {
    %c0_i32 = arith.constant 0 : i32
    %c0_i32_0 = arith.constant 0 : i32
    return %c0_i32, %arg0 : i32, i32
  }
  func.func @transform_3(%arg0: i32, %arg1: memref<1xi32, #tpu.memory_space<smem>>) -> (i32, i32) {
    %c0_i32 = arith.constant 0 : i32
    %c0_i32_0 = arith.constant 0 : i32
    return %c0_i32, %arg0 : i32, i32
  }
  func.func @transform_4(%arg0: i32, %arg1: memref<1xi32, #tpu.memory_space<smem>>) -> (i32, i32) {
    %c0_i32 = arith.constant 0 : i32
    %c0_i32_0 = arith.constant 0 : i32
    return %c0_i32, %arg0 : i32, i32
  }
}

</mosaic_0001>

<llo_original>
// kernel: tpu_custom_call.1
$region0: #{tpu_custom_call.1}
  #allocation0 [shape = 'u32[]', space=smem, size = 0x4, offset = 0x4, fixed_abs, tag = 'smem constant byte address 0x4 - core index']
  #allocation1 [shape = 'u32[144,128]{1,0:T(1,128)}', space=vmem, size = 0x12000, scoped, tag = 'internal scratch']
  #allocation2 [shape = 's32[1]{0}', space=sflag, size = 0x4, scoped, tag = 'scoped memory for tpu_custom_call.1']
  #allocation3 [shape = 's32[1]{0:T(128)S(6)}', space=smem, size = 0x200, scoped, tag = 'prefetched SMEM operand 0']
  %s0 = inlined_call_operand.<no memory space> [shape: s32[1], index: 0, kind: input, shape index: {}]
  %s1 = inlined_call_operand.hbm [shape: f32[8,128], index: 1, kind: input, shape index: {}]
  %s2 = inlined_call_operand.vmem [shape: s8[8,1], index: 2, kind: input, shape index: {}]
  %s3 = inlined_call_operand.vmem [shape: f32[1,128], index: 3, kind: input, shape index: {}]
  %s4 = inlined_call_operand.vmem [shape: f32[1,128], index: 4, kind: input, shape index: {}]
  %s5 = inlined_call_operand.hbm [shape: f32[8,128], index: 5, kind: output, shape index: {}]
  %s6 = sld [smem:[#allocation0]]
  $region30: #{tpu_custom_call.1} parent=0
    _
  %s8 = ssub.s32 1, %s6
  %s9 = scalar_select 0, %s8, %s6
  %10 = sst [smem:[#allocation3]] %s0
  $region1: #{tpu_custom_call.1} parent=0
    #allocation4 [shape = 'u8[4096]{0}', space=vmem, size = 0x1000, scoped, tag = 'input window, operand 1, single buffered']
    #allocation5 [shape = 's32[1]{0}', space=sflag, size = 0x4, scoped, tag = 'scoped memory for tpu_custom_call.1']
    #allocation6 [shape = 's32[1]{0}', space=sflag, size = 0x4, scoped, tag = 'scoped memory for tpu_custom_call.1']
    #allocation7 [shape = 'u8[4096]{0}', space=vmem, size = 0x1000, scoped, tag = 'output window, operand 0, single buffered']
    %11 = vsyncpa [#allocation5], 0
    %12 = vsyncpa [#allocation6], 0
    // Predicated region
    $region2: #{tpu_custom_call.1} parent=1 // pred_check
      _
    $region3: #{tpu_custom_call.1} parent=1 // pred_check_branch
      %14 = sbr.rel (0) target = $region5
    $region4: #{tpu_custom_call.1} parent=1 // pred_region
      %s16 = ssub.s32 128, 128
      %17 = vsyncadd [#allocation5], %s16
      %s19 = sshll.u32 [#allocation4], 4
      %s20 = int_to_ptr.vmem [resolvable:$true] %s19
      %22 = dma.hbm_to_vmem [thread:$0]  %s1, 128, %s20, [#allocation5]
    $region5: #{tpu_custom_call.1} parent=1 // pred_fallthru
      _
    // Predicated region
    $region6: #{tpu_custom_call.1} parent=1 // pred_check
      _
    $region7: #{tpu_custom_call.1} parent=1 // pred_check_branch
      %24 = sbr.rel (0) target = $region9
    $region8: #{tpu_custom_call.1} parent=1 // pred_region
      _
    $region9: #{tpu_custom_call.1} parent=1 // pred_fallthru
      _
    // Predicated region
    $region10: #{tpu_custom_call.1} parent=1 // pred_check
      _
    $region11: #{tpu_custom_call.1} parent=1 // pred_check_branch
      %26 = sbr.rel (0) target = $region13
    $region12: #{tpu_custom_call.1} parent=1 // pred_region
      _
    $region13: #{tpu_custom_call.1} parent=1 // pred_fallthru
      _
    // Predicated region
    $region14: #{tpu_custom_call.1} parent=1 // pred_check
      _
    $region15: #{tpu_custom_call.1} parent=1 // pred_check_branch
      %28 = sbr.rel (0) target = $region17
    $region16: #{tpu_custom_call.1} parent=1 // pred_region
      _
    $region17: #{tpu_custom_call.1} parent=1 // pred_fallthru
      _
    // Predicated region
    $region18: #{tpu_custom_call.1} parent=1 // pred_check
      _
    $region19: #{tpu_custom_call.1} parent=1 // pred_check_branch
      %30 = sbr.rel (0) target = $region21
    $region20: #{tpu_custom_call.1} parent=1 // pred_region
      %31 = dma.done [#allocation5], 128
    $region21: #{tpu_custom_call.1} parent=1 // pred_fallthru
      _
    %v32 = vld [vmem:[#allocation4] sm:$0xff]
    %v33 = vld [vmem:[%s2] sm:$0x3]
    %v34 = vunpack.c.0.s8 %v33
    %v35 = vcvt.s32.f32 %v34
    %s36 = sld [smem:[#allocation3]]
    %s37 = scvt.s32.f32 %s36
    %s38 = smax.f32 %s37, 1.0
    %v39 = vstv %s38
    %v40 = vrcp.pop %v39
    %s41 = vtos %v40
    %43 = vset.pattern.permute.xlu0 0
    %44 = vperm.xlu0 %43, %v35
    %v45 = vpop.permute.xlu0 %44
    %v47 = vmul.f32 %v32, %v45
    %v48 = vrot.slane %v47, 4
    %v49 = vadd.f32 %v47, %v48
    %v50 = vrot.slane %v49, 2
    %v51 = vadd.f32 %v49, %v50
    %v52 = vrot.slane %v51, 1
    %v53 = vadd.f32 %v51, %v52
    %v54 = vmul.f32 %v47, %v32
    %v55 = vrot.slane %v54, 4
    %v56 = vadd.f32 %v54, %v55
    %v57 = vrot.slane %v56, 2
    %v58 = vadd.f32 %v56, %v57
    %v59 = vrot.slane %v58, 1
    %v60 = vadd.f32 %v58, %v59
    %v61 = vstv %s41
    %v62 = vmul.f32 %v53, %v61
    %v63 = vmul.f32 %v60, %v61
    %v64 = vmul.f32 %v62, %v62
    %v65 = vsub.f32 %v63, %v64
    %v66 = vmax.f32 %v65, 0.0
    %v67 = vadd.f32 %v66, 1e-05
    %v68 = vrsqrt.pop %v67
    %v69 = vld [vmem:[%s3] sm:$0x1]
    %v70 = vmul.f32 %v68, %v69
    %v71 = vld [vmem:[%s4] sm:$0x1]
    %v72 = vmul.f32 %v62, %v70
    %v73 = vsub.f32 %v71, %v72
    %v74 = vlaneseq
    %v75 = vshrl.u32 %v74, 7
    %v76 = vsub.s32 0, %v75
    %v77 = vrot.slane %v70, %v76
    %v78 = vmul.f32 %v32, %v77
    %v80 = vlaneseq
    %v81 = vshrl.u32 %v80, 7
    %v82 = vsub.s32 0, %v81
    %v83 = vrot.slane %v73, %v82
    %v85 = vadd.f32 %v78, %v83
    %v86 = vmul.f32 %v85, %v45
    %87 = vst [vmem:[#allocation7] sm:$0xff] %v86
    // Predicated region
    $region22: #{tpu_custom_call.1} parent=1 // pred_check
      _
    $region23: #{tpu_custom_call.1} parent=1 // pred_check_branch
      %89 = sbr.rel (0) target = $region25
    $region24: #{tpu_custom_call.1} parent=1 // pred_region
      %s91 = ssub.s32 128, 128
      %92 = vsyncadd [#allocation6], %s91
      %s94 = sshll.u32 [#allocation7], 4
      %s95 = int_to_ptr.vmem [resolvable:$true] %s94
      %97 = dma.vmem_to_hbm [thread:$0]  %s95, 128, %s5, [#allocation6]
    $region25: #{tpu_custom_call.1} parent=1 // pred_fallthru
      _
    // Predicated region
    $region26: #{tpu_custom_call.1} parent=1 // pred_check
      _
    $region27: #{tpu_custom_call.1} parent=1 // pred_check_branch
      %99 = sbr.rel (0) target = $region29
    $region28: #{tpu_custom_call.1} parent=1 // pred_region
      %100 = dma.done [#allocation6], 128
    $region29: #{tpu_custom_call.1} parent=1 // pred_fallthru
      _
    %101 = vsyncpa [#allocation5], 1
    %102 = vsyncpa [#allocation6], 1

</llo_original>
